<compile_context>
chip_gen: v6e
topology: v6e:2x2x1
jax: 0.10.0
libtpu: 0.0.40
codegen_flags: <defaults>
</compile_context>

<pallas_src>
import jax
import jax.numpy as jnp
from jax.experimental import pallas as pl
from jax.experimental.pallas import tpu as pltpu

# ~4 MiB per input block.  With double-buffered input + output that is
# ~16 MiB of VMEM, comfortably inside the 32 MiB default scoped limit on
# v6e/v7x (and the 16 MiB v5e default still fits the small-shape cases; the
# row cap below shrinks blocks when needed anyway).
_TARGET_TILE_BYTES = 4 * 1024 * 1024


def _sigmoid_kernel(x_ref, o_ref):
    # Compute in f32: one code path that is also correct on v5e
    # (no bf16 VPU/EUP there).
    xf = x_ref[...].astype(jnp.float32)
    e = jnp.exp(-xf)                                   # EUP
    o_ref[...] = pl.reciprocal(1.0 + e, approx=True).astype(o_ref.dtype)  # EUP


def _softmax2d_kernel(x_ref, o_ref):
    # x_ref: (1, C, block_rows, 128); reduce over axis=1 (channels, a leading
    # dim -> per-element VPU max/add across vregs, no cross-lane shuffles).
    xf = x_ref[...].astype(jnp.float32)
    m = jnp.max(xf, axis=1, keepdims=True)
    e = jnp.exp(xf - m)                                # EUP
    s = jnp.sum(e, axis=1, keepdims=True)
    inv = pl.reciprocal(s, approx=True)                # once per spatial pos
    o_ref[...] = (e * inv).astype(o_ref.dtype)


def _round_up(v, m):
    return ((v + m - 1) // m) * m


def _sigmoid(x):
    orig_shape = x.shape
    dtype = x.dtype
    itemsize = jnp.dtype(dtype).itemsize

    lanes = 512                                        # lane-dense last dim
    flat = x.reshape(-1)
    total = flat.shape[0]
    rows = -(-total // lanes)

    max_rows = max(8, (_TARGET_TILE_BYTES // (lanes * itemsize)) // 8 * 8)
    block_rows = min(max_rows, _round_up(rows, 8))
    rows_padded = _round_up(rows, block_rows)
    padded_total = rows_padded * lanes
    if padded_total != total:
        flat = jnp.pad(flat, (0, padded_total - total))
    x2 = flat.reshape(rows_padded, lanes)

    out = pl.pallas_call(
        _sigmoid_kernel,
        out_shape=jax.ShapeDtypeStruct((rows_padded, lanes), dtype),
        grid=(rows_padded // block_rows,),
        in_specs=[pl.BlockSpec((block_rows, lanes), lambda i: (i, 0))],
        out_specs=pl.BlockSpec((block_rows, lanes), lambda i: (i, 0)),
        compiler_params=pltpu.CompilerParams(dimension_semantics=("parallel",)),
    )(x2)
    return out.reshape(-1)[:total].reshape(orig_shape)


def _softmax2d(x):
    N, C, H, W = x.shape
    dtype = x.dtype
    itemsize = jnp.dtype(dtype).itemsize

    lanes = 128
    S = H * W
    s_rows = -(-S // lanes)

    # Block size divides the target bytes by C so (C, block_rows, 128) stays
    # within budget even for wide channel counts.
    max_rows = max(8, (_TARGET_TILE_BYTES // (C * lanes * itemsize)) // 8 * 8)
    block_rows = min(max_rows, _round_up(s_rows, 8))
    rows_padded = _round_up(s_rows, block_rows)
    s_pad = rows_padded * lanes

    x3 = x.reshape(N, C, S)
    if s_pad != S:
        # spatial padding only -> never contaminates the channel reduction
        x3 = jnp.pad(x3, ((0, 0), (0, 0), (0, s_pad - S)))
    x4 = x3.reshape(N, C, rows_padded, lanes)

    out = pl.pallas_call(
        _softmax2d_kernel,
        out_shape=jax.ShapeDtypeStruct((N, C, rows_padded, lanes), dtype),
        grid=(N, rows_padded // block_rows),
        in_specs=[pl.BlockSpec((1, C, block_rows, lanes),
                               lambda n, s: (n, 0, s, 0))],
        out_specs=pl.BlockSpec((1, C, block_rows, lanes),
                               lambda n, s: (n, 0, s, 0)),
        compiler_params=pltpu.CompilerParams(
            dimension_semantics=("parallel", "parallel")),
    )(x4)
    return out.reshape(N, C, s_pad)[:, :, :S].reshape(N, C, H, W)


def activation(x, mode="identity"):
    """Pallas equivalent of Activation(mode)(x) for NCHW input x."""
    if mode is None or mode == "identity":
        return x                                    # no kernel, no HBM traffic
    if mode == "sigmoid":
        return _sigmoid(x)
    if mode == "softmax2d":
        return _softmax2d(x)
    # TODO(synk): arbitrary callables passed to Activation.__init__ have no
    # generic Pallas translation; only the named modes are supported here.
    raise ValueError(f"unsupported activation: {mode}")


def _reference(x, mode):
    if mode == "identity":
        return x
    if mode == "sigmoid":
        return jax.nn.sigmoid(x.astype(jnp.float32)).astype(x.dtype)
    if mode == "softmax2d":
        return jax.nn.softmax(x.astype(jnp.float32), axis=1).astype(x.dtype)
    raise ValueError(mode)


if __name__ == "__main__":
    key = jax.random.PRNGKey(0)
    # small NCHW input consistent with the module's usage (segmentation logits)
    x = jax.random.normal(key, (2, 4, 16, 16), dtype=jnp.float32)

    ok = True
    for mode in ("identity", "sigmoid", "softmax2d"):
        out = jax.block_until_ready(activation(x, mode=mode))
        ref = _reference(x, mode)
        # tolerance accommodates pl.reciprocal(approx=True) (EUP approx rcp)
        if not jnp.allclose(out, ref, atol=2e-3, rtol=2e-3):
            ok = False
            err = jnp.max(jnp.abs(out.astype(jnp.float32) - ref.astype(jnp.float32)))
            print(f"MISMATCH in mode={mode}: max abs err = {err}")

    if ok:
        print("KERNEL_OK")
</pallas_src>

<mosaic_0001>
module attributes {stable_mosaic.version = 11 : i64} {
  func.func @_sigmoid_kernel(%arg0: i32, %arg1: memref<8x512xf32, #tpu.memory_space<vmem>>, %arg2: memref<8x512xf32, #tpu.memory_space<vmem>>) attributes {dimension_semantics = [#tpu.dimension_semantics<parallel>], iteration_bounds = array<i64: 1>, scalar_prefetch = 0 : i64, scratch_operands = 0 : i64, tpu.core_type = #tpu.core_type<tc>, window_params = [{transform_indices = @transform_0, window_bounds = array<i64: 8, 512>}, {transform_indices = @transform_1, window_bounds = array<i64: 8, 512>}]} {
    %c0 = arith.constant 0 : index
    %c0_0 = arith.constant 0 : index
    %0 = vector.load %arg1[%c0, %c0_0] : memref<8x512xf32, #tpu.memory_space<vmem>>, vector<8x512xf32>
    %cst = arith.constant 0.000000e+00 : f32
    %1 = vector.broadcast %cst : f32 to vector<8x512xf32>
    %2 = arith.subf %1, %0 : vector<8x512xf32>
    %3 = math.exp %2 : vector<8x512xf32>
    %cst_1 = arith.constant 1.000000e+00 : f32
    %4 = vector.broadcast %cst_1 : f32 to vector<8x512xf32>
    %5 = arith.addf %4, %3 : vector<8x512xf32>
    %6 = tpu.reciprocal %5 {approx = true} : vector<8x512xf32> -> vector<8x512xf32>
    %c0_2 = arith.constant 0 : index
    %c0_3 = arith.constant 0 : index
    %7 = vector.load %arg2[%c0_2, %c0_3] : memref<8x512xf32, #tpu.memory_space<vmem>>, vector<8x512xf32>
    tpu.vector_store %arg2[%c0_2, %c0_3], %6 {strides = array<i32>} : memref<8x512xf32, #tpu.memory_space<vmem>>, vector<8x512xf32>,
    return
  }
  func.func @transform_0(%arg0: i32) -> (i32, i32) {
    %c0_i32 = arith.constant 0 : i32
    %c0_i32_0 = arith.constant 0 : i32
    return %arg0, %c0_i32 : i32, i32
  }
  func.func @transform_1(%arg0: i32) -> (i32, i32) {
    %c0_i32 = arith.constant 0 : i32
    %c0_i32_0 = arith.constant 0 : i32
    return %arg0, %c0_i32 : i32, i32
  }
}

</mosaic_0001>

<llo_original>
// kernel: tpu_custom_call.1
$region0: #{tpu_custom_call.1}
  #allocation0 [shape = 'u32[]', space=smem, size = 0x4, offset = 0x4, fixed_abs, tag = 'smem constant byte address 0x4 - core index']
  #allocation1 [shape = 'u32[144,128]{1,0:T(1,128)}', space=vmem, size = 0x12000, scoped, tag = 'internal scratch']
  %s0 = inlined_call_operand.hbm [shape: f32[8,512], index: 0, kind: input, shape index: {}]
  %s1 = inlined_call_operand.hbm [shape: f32[8,512], index: 1, kind: output, shape index: {}]
  %s2 = sld [smem:[#allocation0]]
  $region18: #{tpu_custom_call.1} parent=0
    _
  %s4 = ssub.s32 1, %s2
  %s5 = scalar_select 0, %s4, %s2
  $region1: #{tpu_custom_call.1} parent=0
    #allocation2 [shape = 'u8[16384]{0}', space=vmem, size = 0x4000, scoped, tag = 'input window, operand 0, single buffered']
    #allocation3 [shape = 's32[1]{0}', space=sflag, size = 0x4, scoped, tag = 'scoped memory for tpu_custom_call.1']
    #allocation4 [shape = 's32[1]{0}', space=sflag, size = 0x4, scoped, tag = 'scoped memory for tpu_custom_call.1']
    #allocation5 [shape = 'u8[16384]{0}', space=vmem, size = 0x4000, scoped, tag = 'output window, operand 0, single buffered']
    %6 = vsyncpa [#allocation3], 0
    %7 = vsyncpa [#allocation4], 0
    // Predicated region
    $region2: #{tpu_custom_call.1} parent=1 // pred_check
      _
    $region3: #{tpu_custom_call.1} parent=1 // pred_check_branch
      %9 = sbr.rel (0) target = $region5
    $region4: #{tpu_custom_call.1} parent=1 // pred_region
      %s11 = ssub.s32 512, 512
      %12 = vsyncadd [#allocation3], %s11
      %s14 = sshll.u32 [#allocation2], 4
      %s15 = int_to_ptr.vmem [resolvable:$true] %s14
      %17 = dma.hbm_to_vmem [thread:$0]  %s0, 512, %s15, [#allocation3]
    $region5: #{tpu_custom_call.1} parent=1 // pred_fallthru
      _
    // Predicated region
    $region6: #{tpu_custom_call.1} parent=1 // pred_check
      _
    $region7: #{tpu_custom_call.1} parent=1 // pred_check_branch
      %19 = sbr.rel (0) target = $region9
    $region8: #{tpu_custom_call.1} parent=1 // pred_region
      %20 = dma.done [#allocation3], 512
    $region9: #{tpu_custom_call.1} parent=1 // pred_fallthru
      _
    %v21 = vld [vmem:[#allocation2] sm:$0xff]
    %v22 = vld [vmem:[#allocation2 + $0x8] sm:$0xff]
    %v23 = vld [vmem:[#allocation2 + $0x10] sm:$0xff]
    %v24 = vld [vmem:[#allocation2 + $0x18] sm:$0xff]
    %v25 = vsub.f32 0.0, %v21
    %v26 = vsub.f32 0.0, %v22
    %v27 = vsub.f32 0.0, %v23
    %v28 = vsub.f32 0.0, %v24
    %v29 = vmul.f32 %v25, 1.442695
    %v30 = vpow.pop %v29
    %v31 = vmul.f32 %v26, 1.442695
    %v32 = vpow.pop %v31
    %v33 = vmul.f32 %v27, 1.442695
    %v34 = vpow.pop %v33
    %v35 = vmul.f32 %v28, 1.442695
    %v36 = vpow.pop %v35
    %v37 = vadd.f32 %v30, 1.0
    %v38 = vadd.f32 %v32, 1.0
    %v39 = vadd.f32 %v34, 1.0
    %v40 = vadd.f32 %v36, 1.0
    %v41 = vrcp.pop %v37
    %v42 = vrcp.pop %v38
    %v43 = vrcp.pop %v39
    %v44 = vrcp.pop %v40
    %45 = vst [vmem:[#allocation5] sm:$0xff] %v41
    %46 = vst [vmem:[#allocation5 + $0x8] sm:$0xff] %v42
    %47 = vst [vmem:[#allocation5 + $0x10] sm:$0xff] %v43
    %48 = vst [vmem:[#allocation5 + $0x18] sm:$0xff] %v44
    // Predicated region
    $region10: #{tpu_custom_call.1} parent=1 // pred_check
      _
    $region11: #{tpu_custom_call.1} parent=1 // pred_check_branch
      %50 = sbr.rel (0) target = $region13
    $region12: #{tpu_custom_call.1} parent=1 // pred_region
      %s52 = ssub.s32 512, 512
      %53 = vsyncadd [#allocation4], %s52
      %s55 = sshll.u32 [#allocation5], 4
      %s56 = int_to_ptr.vmem [resolvable:$true] %s55
      %58 = dma.vmem_to_hbm [thread:$0]  %s56, 512, %s1, [#allocation4]
    $region13: #{tpu_custom_call.1} parent=1 // pred_fallthru
      _
    // Predicated region
    $region14: #{tpu_custom_call.1} parent=1 // pred_check
      _
    $region15: #{tpu_custom_call.1} parent=1 // pred_check_branch
      %60 = sbr.rel (0) target = $region17
    $region16: #{tpu_custom_call.1} parent=1 // pred_region
      %61 = dma.done [#allocation4], 512
    $region17: #{tpu_custom_call.1} parent=1 // pred_fallthru
      _
    %62 = vsyncpa [#allocation3], 1
    %63 = vsyncpa [#allocation4], 1

</llo_original>
